<compile_context>
chip_gen: v7x
topology: tpu7x:2x2x1
jax: 0.10.0
libtpu: 0.0.40
codegen_flags: <defaults>
</compile_context>

<pallas_src>
import functools

import jax
import jax.numpy as jnp
from jax.experimental import pallas as pl
from jax.experimental.pallas import tpu as pltpu

_LANE = 128


def compute_resolution(size, padding, kernel_size, stride, dilation=1):
    # integer floor division (matches the PyTorch reference numerically)
    return (size + 2 * padding - dilation * (kernel_size - 1) - 1) // stride + 1


def _round_up(x, m):
    return ((x + m - 1) // m) * m


def _choose_tiles(M, Kp, Np, in_itemsize, out_itemsize,
                  budget_bytes=40 * 1024 * 1024):
    """Pick (tile_p, tile_n), both multiples of 128, within a v7x-safe VMEM budget."""
    # N tile: keep the double-buffered weight tile within half the budget.
    # 128 always divides Np, so the fallback keeps the grid exact.
    tile_n = Np if 2 * Kp * Np * in_itemsize <= budget_bytes // 2 else _LANE
    # P tile: prefer 256 (one full v6e/v7x MXU M-pass); use 128 when the
    # flattened problem is small so there are still >= 2 pipeline steps.
    fixed = 2 * Kp * tile_n * in_itemsize + 2 * tile_n * 4
    per_row = 2 * Kp * in_itemsize + 2 * tile_n * out_itemsize
    max_rows = max(_LANE, ((budget_bytes - fixed) // per_row) // _LANE * _LANE)
    tile_p = 256 if (M > 256 and max_rows >= 256) else _LANE
    return int(min(tile_p, max_rows)), int(tile_n)


# ---------------------------------------------------------------------------
# Pallas kernel: one (tile_p, Kp) x (Kp, tile_n) MXU matmul per grid step,
# f32 accumulation + f32 bias add, store once in the final (x.dtype) dtype.
# ---------------------------------------------------------------------------
def _proj_kernel(p_ref, w_ref, b_ref, o_ref):
    # p_ref: (tile_p, Kp) compute dtype; w_ref: (Kp, tile_n) compute dtype
    # b_ref: (1, tile_n) f32;            o_ref: (tile_p, tile_n) out dtype
    acc = jnp.dot(p_ref[...], w_ref[...], preferred_element_type=jnp.float32)
    o_ref[...] = (acc + b_ref[...]).astype(o_ref.dtype)


def _proj_pallas(patches, w_flat, bias, tile_p, tile_n, out_dtype):
    M_pad, Kp = patches.shape
    Np = w_flat.shape[1]
    grid = (M_pad // tile_p, Np // tile_n)

    flops = 2 * M_pad * Kp * Np
    bytes_accessed = (
        patches.size * patches.dtype.itemsize
        + w_flat.size * w_flat.dtype.itemsize
        + bias.size * bias.dtype.itemsize
        + M_pad * Np * jnp.dtype(out_dtype).itemsize
    )

    return pl.pallas_call(
        _proj_kernel,
        out_shape=jax.ShapeDtypeStruct((M_pad, Np), out_dtype),
        grid_spec=pltpu.PrefetchScalarGridSpec(
            num_scalar_prefetch=0,
            grid=grid,
            in_specs=[
                pl.BlockSpec((tile_p, Kp), lambda m, n: (m, 0)),
                # Weight block index is constant along the outer (m) axis; for
                # the typical single-N-tile case it is DMA'd exactly once.
                # TODO(synk): pipeline_mode=pl.Buffered(1) here would reclaim the
                #   weight's second VMEM buffer on v7x; left out to keep lowering
                #   risk at zero.
                pl.BlockSpec((Kp, tile_n), lambda m, n: (0, n)),
                pl.BlockSpec((1, tile_n), lambda m, n: (0, n)),
            ],
            out_specs=pl.BlockSpec((tile_p, tile_n), lambda m, n: (m, n)),
        ),
        compiler_params=pltpu.CompilerParams(
            dimension_semantics=("parallel", "parallel"),
            vmem_limit_bytes=48 * 1024 * 1024,
        ),
        cost_estimate=pl.CostEstimate(
            flops=flops, transcendentals=0, bytes_accessed=bytes_accessed),
    )(patches, w_flat, bias)


# ---------------------------------------------------------------------------
# im2col extraction (NCHW -> (B, P, C*kh*kw)), feature order (c, kh, kw)
# matching the flattening of the PyTorch Conv2d weight (dim, C, kh, kw).
# Runs as a single fused XLA producer emitting compute-dtype patches.
# ---------------------------------------------------------------------------
def _extract_patches(x_nchw, kernel_size, stride, padding):
    B, C, H, W = x_nchw.shape
    H_out = compute_resolution(H, padding, kernel_size, stride)
    W_out = compute_resolution(W, padding, kernel_size, stride)
    x_p = jnp.pad(x_nchw, ((0, 0), (0, 0), (padding, padding), (padding, padding)))
    rows = []
    for i in range(kernel_size):
        for j in range(kernel_size):
            slab = x_p[:, :,
                       i:i + stride * (H_out - 1) + 1:stride,
                       j:j + stride * (W_out - 1) + 1:stride]
            rows.append(slab)
    # (kh*kw, B, C, H_out, W_out) -> (B, H_out, W_out, C, kh*kw)
    stacked = jnp.stack(rows, axis=0)
    stacked = jnp.transpose(stacked, (1, 3, 4, 2, 0))
    patches = stacked.reshape(B, H_out * W_out, C * kernel_size * kernel_size)
    return patches, H_out, W_out


# ---------------------------------------------------------------------------
# Module-level jitted forward: weights/bias are traced arguments (no stale
# compile-time constants, no per-instance retrace).
# ---------------------------------------------------------------------------
@functools.partial(
    jax.jit,
    static_argnames=("patch_size", "stride", "padding", "dim", "use_2d"))
def _overlap_patch_embed_fwd(x, w_flat, bias, *, patch_size, stride, padding,
                             dim, use_2d):
    compute_dtype = w_flat.dtype                      # prepared in __init__
    B, C = x.shape[0], x.shape[1]
    patches, H_out, W_out = _extract_patches(x, patch_size, stride, padding)
    P = H_out * W_out
    K = C * patch_size * patch_size
    Kp, Np = w_flat.shape                             # already 128-padded

    out_dtype = x.dtype
    M = B * P
    tile_p, tile_n = _choose_tiles(
        M, Kp, Np, jnp.dtype(compute_dtype).itemsize, jnp.dtype(out_dtype).itemsize)
    M_pad = _round_up(M, tile_p)                      # pad TOTAL rows once, not per image

    patches = patches.reshape(M, K)
    patches = jnp.pad(patches, ((0, M_pad - M), (0, Kp - K))).astype(compute_dtype)

    out = _proj_pallas(patches, w_flat, bias, tile_p, tile_n, out_dtype)
    out = out[:M, :dim].reshape(B, P, dim)            # (B, P, dim) in x.dtype
    if use_2d:
        out = out.reshape(B, H_out, W_out, dim)       # 'b e h w -> b h w e'
    return out


class OverlapPatchEmbed:
    """JAX/Pallas port of the PyTorch OverlapPatchEmbed module."""

    def __init__(self, img_size=224, patch_size=16, stride=14, in_chans=3,
                 dim=192, use_2d=False, key=None, compute_dtype=jnp.bfloat16):
        self.use_2d = use_2d
        self.patch_size = patch_size
        self.stride = stride
        self.padding = patch_size // 2
        self.in_chans = in_chans
        self.dim = dim
        self.compute_dtype = jnp.dtype(compute_dtype)
        self.num_row_patches = compute_resolution(
            size=img_size, padding=self.padding, kernel_size=patch_size,
            stride=stride)

        key = jax.random.PRNGKey(0) if key is None else key
        kw_key, kb_key = jax.random.split(key)
        fan_in = in_chans * patch_size * patch_size
        bound = 1.0 / (fan_in ** 0.5)
        # Raw Conv2d-style parameters (kept for reference / export parity).
        self.weight = jax.random.uniform(
            kw_key, (dim, in_chans, patch_size, patch_size),
            minval=-bound, maxval=bound, dtype=jnp.float32)
        self.bias = jax.random.uniform(
            kb_key, (dim,), minval=-bound, maxval=bound, dtype=jnp.float32)

        # Precomputed GEMM-ready parameters (perf-review item): transposed,
        # K/N padded to 128 granules, cast once to the compute dtype.
        K = in_chans * patch_size * patch_size
        self.Kp = _round_up(K, _LANE)
        self.Np = _round_up(dim, _LANE)
        w_flat = self.weight.reshape(dim, K).T                       # (K, N), order (c, kh, kw)
        w_flat = jnp.pad(w_flat, ((0, self.Kp - K), (0, self.Np - dim)))
        self.w_prepared = w_flat.astype(self.compute_dtype)          # (Kp, Np)
        self.b_prepared = jnp.pad(self.bias, (0, self.Np - dim)) \
                             .reshape(1, self.Np).astype(jnp.float32)  # (1, Np)

    def __call__(self, x):
        # x: (B, C, H, W) NCHW, same as the PyTorch module.
        return _overlap_patch_embed_fwd(
            x, self.w_prepared, self.b_prepared,
            patch_size=self.patch_size, stride=self.stride,
            padding=self.padding, dim=self.dim, use_2d=self.use_2d)


def _reference(x, weight, bias, stride, padding):
    """Pure-JAX reference: conv2d + rearrange 'b e h w -> b (h w) e'."""
    y = jax.lax.conv_general_dilated(
        x, weight, window_strides=(stride, stride),
        padding=((padding, padding), (padding, padding)),
        dimension_numbers=("NCHW", "OIHW", "NCHW"))
    y = y + bias.reshape(1, -1, 1, 1)
    B, E, H, W = y.shape
    return jnp.transpose(y, (0, 2, 3, 1)).reshape(B, H * W, E)


if __name__ == "__main__":
    # Small shapes consistent with the module: img 16x16, patch 4, stride 2,
    # in_chans 4, dim 32  ->  H_out = W_out = 9, P = 81, K = 64.
    B, C, H, W = 2, 4, 16, 16
    x = jax.random.normal(jax.random.PRNGKey(0), (B, C, H, W), dtype=jnp.float32)

    # f32 compute path: tight check against the conv reference.
    mod_f32 = OverlapPatchEmbed(img_size=H, patch_size=4, stride=2,
                                in_chans=C, dim=32, use_2d=False,
                                key=jax.random.PRNGKey(42),
                                compute_dtype=jnp.float32)
    out_f32 = jax.block_until_ready(mod_f32(x))
    ref = _reference(x, mod_f32.weight, mod_f32.bias, mod_f32.stride,
                     mod_f32.padding)
    assert out_f32.shape == ref.shape, (out_f32.shape, ref.shape)
    assert jnp.allclose(out_f32, ref, atol=1e-4, rtol=1e-4), \
        "f32 path mismatch vs reference conv"

    # bf16 compute path (default, perf config): loosened tolerance vs f32 conv.
    mod_bf16 = OverlapPatchEmbed(img_size=H, patch_size=4, stride=2,
                                 in_chans=C, dim=32, use_2d=False,
                                 key=jax.random.PRNGKey(42),
                                 compute_dtype=jnp.bfloat16)
    out_bf16 = jax.block_until_ready(mod_bf16(x))
    assert out_bf16.shape == ref.shape, (out_bf16.shape, ref.shape)
    assert jnp.allclose(out_bf16.astype(jnp.float32), ref, atol=2e-2, rtol=2e-2), \
        "bf16 path mismatch vs reference conv"

    print("KERNEL_OK")
</pallas_src>

<mosaic_0001>
module attributes {stable_mosaic.version = 11 : i64} {
  func.func @_proj_kernel(%arg0: i32, %arg1: i32, %arg2: memref<128x128xf32, #tpu.memory_space<vmem>>, %arg3: memref<128x128xf32, #tpu.memory_space<vmem>>, %arg4: memref<1x128xf32, #tpu.memory_space<vmem>>, %arg5: memref<128x128xf32, #tpu.memory_space<vmem>>) attributes {dimension_semantics = [#tpu.dimension_semantics<parallel>, #tpu.dimension_semantics<parallel>], iteration_bounds = array<i64: 2, 1>, scalar_prefetch = 0 : i64, scratch_operands = 0 : i64, tpu.core_type = #tpu.core_type<tc>, window_params = [{transform_indices = @transform_0, window_bounds = array<i64: 128, 128>}, {transform_indices = @transform_1, window_bounds = array<i64: 128, 128>}, {transform_indices = @transform_2, window_bounds = array<i64: 1, 128>}, {transform_indices = @transform_3, window_bounds = array<i64: 128, 128>}]} {
    %c0 = arith.constant 0 : index
    %c0_0 = arith.constant 0 : index
    %0 = vector.load %arg2[%c0, %c0_0] : memref<128x128xf32, #tpu.memory_space<vmem>>, vector<128x128xf32>
    %c0_1 = arith.constant 0 : index
    %c0_2 = arith.constant 0 : index
    %1 = vector.load %arg3[%c0_1, %c0_2] : memref<128x128xf32, #tpu.memory_space<vmem>>, vector<128x128xf32>
    %cst = arith.constant dense<0.000000e+00> : vector<128x128xf32>
    %2 = tpu.matmul %0, %1, %cst {dimension_numbers = #tpu.dot_dimension_numbers<[1], [0], [0], [1], [0, 0, 1, 1], [], []>} : vector<128x128xf32>, vector<128x128xf32>, vector<128x128xf32> -> vector<128x128xf32>
    %c0_3 = arith.constant 0 : index
    %c0_4 = arith.constant 0 : index
    %3 = vector.load %arg4[%c0_3, %c0_4] : memref<1x128xf32, #tpu.memory_space<vmem>>, vector<1x128xf32>
    %4 = vector.broadcast %3 : vector<1x128xf32> to vector<128x128xf32>
    %5 = arith.addf %2, %4 : vector<128x128xf32>
    %c0_5 = arith.constant 0 : index
    %c0_6 = arith.constant 0 : index
    %6 = vector.load %arg5[%c0_5, %c0_6] : memref<128x128xf32, #tpu.memory_space<vmem>>, vector<128x128xf32>
    tpu.vector_store %arg5[%c0_5, %c0_6], %5 {strides = array<i32>} : memref<128x128xf32, #tpu.memory_space<vmem>>, vector<128x128xf32>,
    return
  }
  func.func @transform_0(%arg0: i32, %arg1: i32) -> (i32, i32) {
    %c0_i32 = arith.constant 0 : i32
    %c0_i32_0 = arith.constant 0 : i32
    return %arg0, %c0_i32 : i32, i32
  }
  func.func @transform_1(%arg0: i32, %arg1: i32) -> (i32, i32) {
    %c0_i32 = arith.constant 0 : i32
    %c0_i32_0 = arith.constant 0 : i32
    return %c0_i32, %arg1 : i32, i32
  }
  func.func @transform_2(%arg0: i32, %arg1: i32) -> (i32, i32) {
    %c0_i32 = arith.constant 0 : i32
    %c0_i32_0 = arith.constant 0 : i32
    return %c0_i32, %arg1 : i32, i32
  }
  func.func @transform_3(%arg0: i32, %arg1: i32) -> (i32, i32) {
    %c0_i32 = arith.constant 0 : i32
    return %arg0, %arg1 : i32, i32
  }
}

</mosaic_0001>

<llo_original>
// kernel: _overlap_patch_embed_fwd.1
$region0: #{_overlap_patch_embed_fwd.1}
  #allocation0 [shape = 'u32[]', space=smem, size = 0x4, offset = 0x4, fixed_abs, tag = 'smem constant byte address 0x4 - core index']
  #allocation1 [shape = 'u32[144,128]{1,0:T(1,128)}', space=vmem, size = 0x12000, scoped, tag = 'internal scratch']
  %s0 = inlined_call_operand.vmem [shape: f32[256,128], index: 0, kind: input, shape index: {}]
  %s1 = inlined_call_operand.vmem [shape: f32[128,128], index: 1, kind: input, shape index: {}]
  %s2 = inlined_call_operand.vmem [shape: f32[1,128], index: 2, kind: input, shape index: {}]
  %s3 = inlined_call_operand.vmem [shape: f32[256,128], index: 3, kind: output, shape index: {}]
  %s4 = sld [smem:[#allocation0]]
  $region45: #{_overlap_patch_embed_fwd.1} parent=0
    _
  %s6 = ssub.s32 1, %s4
  %s7 = scalar_select 0, %s6, %s4
  loop: start=0, step=1, limit=4
  $region2: #{_overlap_patch_embed_fwd.1} parent=0 // loop_pre_header
    _
  $region3: #{_overlap_patch_embed_fwd.1} parent=0 // loop_header
    %s9 = sphi 0, %s13
    %p10 = scmp.ge.s32.totalorder %s9, 4
    %s16 = sphi 0, %s28
    %s17 = sphi 0, %s24
    %s18 = sphi 0, %s16
    %s19 = sphi 0, %s17
    %s20 = sphi 0, %s18
    %s21 = sphi 0, %s19
    %s31 = sphi 0, %s33
    %s34 = sphi 0, %s31
    %s35 = sphi 0, %s34
    %s51 = sphi 0, %s35
    %s57 = sphi 0, %s59
    %s60 = sphi 0, %s57
    %s61 = sphi 0, %s60
    %s77 = sphi 0, %s61
    %s83 = sphi 0, %s85
    %s86 = sphi 0, %s83
    %s87 = sphi 0, %s86
    %s103 = sphi 0, %s87
    %s111 = sphi 0, %s113
    %s114 = sphi 0, %s111
    %s115 = sphi 0, %s114
    %s131 = sphi 0, %s115
  $region4: #{_overlap_patch_embed_fwd.1} parent=0 // loop_header_branch
    %12 = sbr.rel (%p10) target = $region8
  $region5: #{_overlap_patch_embed_fwd.1} parent=0 // loop_body
    %s14 = ssub.s32 %s9, 1
    %s15 = ssub.s32 %s9, 2
    %s22 = sadd.s32 1, %s17
    %p23 = scmp.ge.s32.totalorder %s22, 1
    %s24 = scalar_select %p23, 0, %s22
    %s25 = sadd.s32 1, %s16
    %s26 = scalar_select %p23, %s25, %s16
    %p27 = scmp.ge.s32.totalorder %s26, 2
    %s28 = scalar_select %p27, 0, %s26
    %s29 = ssub.s32 %s16, %s28
    %p30 = scmp.eq.s32.totalorder %s29, 0
    %s32 = sadd.s32 %s31, 1
    %s33 = scalar_select %p30, %s31, %s32
    %p36 = pneg %p30
    %p37 = scmp.eq.s32.totalorder %s9, 1
    %p38 = por %p36, %p37
    %p39 = scmp.ne.s32.totalorder %s31, %s34
    %p40 = scmp.eq.s32.totalorder %s9, 0
    %p41 = por %p39, %p40
    %p42 = scmp.ne.s32.totalorder %s31, %s34
    %p43 = scmp.eq.s32.totalorder %s14, 1
    %p44 = por %p42, %p43
    %p45 = scmp.ne.s32.totalorder %s34, %s35
    %p46 = scmp.eq.s32.totalorder %s14, 0
    %p47 = por %p45, %p46
    %p48 = scmp.ne.s32.totalorder %s34, %s35
    %p49 = scmp.eq.s32.totalorder %s15, 1
    %p50 = por %p48, %p49
    %p52 = scmp.ne.s32.totalorder %s35, %s51
    %p53 = scmp.eq.s32.totalorder %s15, 0
    %p54 = por %p52, %p53
    %s55 = ssub.s32 %s17, %s24
    %p56 = scmp.eq.s32.totalorder %s55, 0
    %s58 = sadd.s32 %s57, 1
    %s59 = scalar_select %p56, %s57, %s58
    %p62 = pneg %p56
    %p63 = scmp.eq.s32.totalorder %s9, 1
    %p64 = por %p62, %p63
    %p65 = scmp.ne.s32.totalorder %s57, %s60
    %p66 = scmp.eq.s32.totalorder %s9, 0
    %p67 = por %p65, %p66
    %p68 = scmp.ne.s32.totalorder %s57, %s60
    %p69 = scmp.eq.s32.totalorder %s14, 1
    %p70 = por %p68, %p69
    %p71 = scmp.ne.s32.totalorder %s60, %s61
    %p72 = scmp.eq.s32.totalorder %s14, 0
    %p73 = por %p71, %p72
    %p74 = scmp.ne.s32.totalorder %s60, %s61
    %p75 = scmp.eq.s32.totalorder %s15, 1
    %p76 = por %p74, %p75
    %p78 = scmp.ne.s32.totalorder %s61, %s77
    %p79 = scmp.eq.s32.totalorder %s15, 0
    %p80 = por %p78, %p79
    %s81 = ssub.s32 %s17, %s24
    %p82 = scmp.eq.s32.totalorder %s81, 0
    %s84 = sadd.s32 %s83, 1
    %s85 = scalar_select %p82, %s83, %s84
    %p88 = pneg %p82
    %p89 = scmp.eq.s32.totalorder %s9, 1
    %p90 = por %p88, %p89
    %p91 = scmp.ne.s32.totalorder %s83, %s86
    %p92 = scmp.eq.s32.totalorder %s9, 0
    %p93 = por %p91, %p92
    %p94 = scmp.ne.s32.totalorder %s83, %s86
    %p95 = scmp.eq.s32.totalorder %s14, 1
    %p96 = por %p94, %p95
    %p97 = scmp.ne.s32.totalorder %s86, %s87
    %p98 = scmp.eq.s32.totalorder %s14, 0
    %p99 = por %p97, %p98
    %p100 = scmp.ne.s32.totalorder %s86, %s87
    %p101 = scmp.eq.s32.totalorder %s15, 1
    %p102 = por %p100, %p101
    %p104 = scmp.ne.s32.totalorder %s87, %s103
    %p105 = scmp.eq.s32.totalorder %s15, 0
    %p106 = por %p104, %p105
    %s107 = ssub.s32 %s16, %s28
    %s108 = ssub.s32 %s17, %s24
    %s109 = sor.u32 %s107, %s108
    %p110 = scmp.eq.s32.totalorder %s109, 0
    %s112 = sadd.s32 %s111, 1
    %s113 = scalar_select %p110, %s111, %s112
    %p116 = pneg %p110
    %p117 = scmp.eq.s32.totalorder %s9, 1
    %p118 = por %p116, %p117
    %p119 = scmp.ne.s32.totalorder %s111, %s114
    %p120 = scmp.eq.s32.totalorder %s9, 0
    %p121 = por %p119, %p120
    %p122 = scmp.ne.s32.totalorder %s111, %s114
    %p123 = scmp.eq.s32.totalorder %s14, 1
    %p124 = por %p122, %p123
    %p125 = scmp.ne.s32.totalorder %s114, %s115
    %p126 = scmp.eq.s32.totalorder %s14, 0
    %p127 = por %p125, %p126
    %p128 = scmp.ne.s32.totalorder %s114, %s115
    %p129 = scmp.eq.s32.totalorder %s15, 1
    %p130 = por %p128, %p129
    %p132 = scmp.ne.s32.totalorder %s115, %s131
    %p133 = scmp.eq.s32.totalorder %s15, 0
    %p134 = por %p132, %p133
    %p135 = scmp.le.s32.totalorder 1, %s9
    %p136 = scmp.lt.s32.totalorder %s9, 3
    %p137 = pnand %p135, %p136
    %p138 = pneg %p137
    // Predicated region
    $region9: #{_overlap_patch_embed_fwd.1} parent=5 // pred_check
      _
    $region10: #{_overlap_patch_embed_fwd.1} parent=5 // pred_check_branch
      %140 = sbr.rel (%p137) target = $region12
    $region11: #{_overlap_patch_embed_fwd.1} parent=5 // pred_region
      %s141 = ssub.s32 %s9, 1
      // Predicated region
      $region13: #{_overlap_patch_embed_fwd.1} parent=11 // pred_check
        %p142 = pneg %p73
      $region14: #{_overlap_patch_embed_fwd.1} parent=11 // pred_check_branch
        %144 = sbr.rel (%p142) target = $region16
      $region15: #{_overlap_patch_embed_fwd.1} parent=11 // pred_region
        %p145 = scmp.lt.s32.totalorder %s19, 0
        %s146 = scalar_select %p145, %s19, 0
        %s147 = smul.addr %s146, 8
        %s148 = scalar_lea.vmem %s1, %s147
      $region16: #{_overlap_patch_embed_fwd.1} parent=11 // pred_fallthru
        _
      // Predicated region
      $region17: #{_overlap_patch_embed_fwd.1} parent=11 // pred_check
        %p149 = pneg %p99
      $region18: #{_overlap_patch_embed_fwd.1} parent=11 // pred_check_branch
        %151 = sbr.rel (%p149) target = $region20
      $region19: #{_overlap_patch_embed_fwd.1} parent=11 // pred_region
        %p152 = scmp.lt.s32.totalorder %s19, 0
        %s153 = scalar_select %p152, %s19, 0
        %s154 = scalar_lea.vmem %s2, %s153
      $region20: #{_overlap_patch_embed_fwd.1} parent=11 // pred_fallthru
        _
    $region12: #{_overlap_patch_embed_fwd.1} parent=5 // pred_fallthru
      _
    %p155 = scmp.lt.s32.totalorder %s9, 2
    // Predicated region
    $region21: #{_overlap_patch_embed_fwd.1} parent=5 // pred_check
      %p156 = pneg %p155
    $region22: #{_overlap_patch_embed_fwd.1} parent=5 // pred_check_branch
      %158 = sbr.rel (%p156) target = $region24
    $region23: #{_overlap_patch_embed_fwd.1} parent=5 // pred_region
      // Predicated region
      $region25: #{_overlap_patch_embed_fwd.1} parent=23 // pred_check
        %p159 = pneg %p41
      $region26: #{_overlap_patch_embed_fwd.1} parent=23 // pred_check_branch
        %161 = sbr.rel (%p159) target = $region28
      $region27: #{_overlap_patch_embed_fwd.1} parent=23 // pred_region
        %s162 = smul.u32 16, %s16
        %p163 = scmp.lt.s32.totalorder %s162, 31
        %s164 = scalar_select %p163, %s162, 31
        %s165 = smul.addr %s164, 8
        %s166 = scalar_lea.vmem %s0, %s165
        %s167 = smul.u32 16, %s16
      $region28: #{_overlap_patch_embed_fwd.1} parent=23 // pred_fallthru
        _
    $region24: #{_overlap_patch_embed_fwd.1} parent=5 // pred_fallthru
      _
    %p168 = scmp.le.s32.totalorder 1, %s9
    %p169 = scmp.lt.s32.totalorder %s9, 3
    %p170 = pnand %p168, %p169
    %p171 = pneg %p170
    // Predicated region
    $region29: #{_overlap_patch_embed_fwd.1} parent=5 // pred_check
      _
    $region30: #{_overlap_patch_embed_fwd.1} parent=5 // pred_check_branch
      %173 = sbr.rel (%p170) target = $region32
    $region31: #{_overlap_patch_embed_fwd.1} parent=5 // pred_region
      %s174 = ssub.s32 %s9, 1
      %s175 = smul.u32 16, %s18
      %p176 = scmp.lt.s32.totalorder %s175, 31
      %s177 = scalar_select %p176, %s175, 31
      %s178 = smul.addr %s177, 8
      %s179 = scalar_lea.vmem %s0, %s178
      %p180 = pneg %p47
      %p181 = pneg %p44
      %p182 = scmp.lt.s32.totalorder %s19, 0
      %s183 = scalar_select %p182, %s19, 0
      %s184 = smul.addr %s183, 8
      %s185 = scalar_lea.vmem %s1, %s184
      %p186 = pneg %p73
      %p187 = pneg %p70
      %p188 = scmp.lt.s32.totalorder %s19, 0
      %s189 = scalar_select %p188, %s19, 0
      %s190 = scalar_lea.vmem %s2, %s189
      %p191 = pneg %p99
      %p192 = pneg %p96
      %p193 = pneg %p127
      %p194 = pneg %p124
      %s195 = smul.u32 16, %s18
      %p196 = scmp.lt.s32.totalorder %s195, 31
      %s197 = scalar_select %p196, %s195, 31
      %p198 = scmp.lt.s32.totalorder %s19, 0
      %s199 = scalar_select %p198, %s19, 0
      %s200 = sadd.s32 %s199, %s197
      %s201 = smul.addr %s200, 8
      %s202 = scalar_lea.vmem %s3, %s201
      %s203 = smul.u32 16, %s18
      %p204 = scmp.lt.s32.totalorder %s203, 31
      %s205 = scalar_select %p204, %s203, 31
      %s206 = smul.addr %s205, 8
      %s207 = scalar_lea.vmem %s0, %s206
      %s208 = smul.u32 16, %s18
      %p209 = scmp.lt.s32.totalorder %s19, 0
      %s210 = scalar_select %p209, %s19, 0
      %s211 = smul.addr %s210, 8
      %s212 = scalar_lea.vmem %s1, %s211
      %p213 = scmp.lt.s32.totalorder %s19, 0
      %s214 = scalar_select %p213, %s19, 0
      %s215 = scalar_lea.vmem %s2, %s214
      %s216 = smul.u32 16, %s18
      %p217 = scmp.lt.s32.totalorder %s216, 31
      %s218 = scalar_select %p217, %s216, 31
      %p219 = scmp.lt.s32.totalorder %s19, 0
      %s220 = scalar_select %p219, %s19, 0
      %s221 = sadd.s32 %s220, %s218
      %s222 = smul.addr %s221, 8
      %s223 = scalar_lea.vmem %s3, %s222
      %s224 = smul.u32 16, %s18
      %v225 = vld [vmem:[%s207] sm:$0xff]
      %v226 = vld [vmem:[%s207 + $0x8] sm:$0xff]
      %v227 = vld [vmem:[%s207 + $0x10] sm:$0xff]
      %v228 = vld [vmem:[%s207 + $0x18] sm:$0xff]
      %v229 = vld [vmem:[%s207 + $0x20] sm:$0xff]
      %v230 = vld [vmem:[%s207 + $0x28] sm:$0xff]
      %v231 = vld [vmem:[%s207 + $0x30] sm:$0xff]
      %v232 = vld [vmem:[%s207 + $0x38] sm:$0xff]
      %v233 = vld [vmem:[%s207 + $0x40] sm:$0xff]
      %v234 = vld [vmem:[%s207 + $0x48] sm:$0xff]
      %v235 = vld [vmem:[%s207 + $0x50] sm:$0xff]
      %v236 = vld [vmem:[%s207 + $0x58] sm:$0xff]
      %v237 = vld [vmem:[%s207 + $0x60] sm:$0xff]
      %v238 = vld [vmem:[%s207 + $0x68] sm:$0xff]
      %v239 = vld [vmem:[%s207 + $0x70] sm:$0xff]
      %v240 = vld [vmem:[%s207 + $0x78] sm:$0xff]
      %v241 = vld [vmem:[%s212] sm:$0xff]
      %v242 = vld [vmem:[%s212 + $0x8] sm:$0xff]
      %v243 = vld [vmem:[%s212 + $0x10] sm:$0xff]
      %v244 = vld [vmem:[%s212 + $0x18] sm:$0xff]
      %v245 = vld [vmem:[%s212 + $0x20] sm:$0xff]
      %v246 = vld [vmem:[%s212 + $0x28] sm:$0xff]
      %v247 = vld [vmem:[%s212 + $0x30] sm:$0xff]
      %v248 = vld [vmem:[%s212 + $0x38] sm:$0xff]
      %v249 = vld [vmem:[%s212 + $0x40] sm:$0xff]
      %v250 = vld [vmem:[%s212 + $0x48] sm:$0xff]
      %v251 = vld [vmem:[%s212 + $0x50] sm:$0xff]
      %v252 = vld [vmem:[%s212 + $0x58] sm:$0xff]
      %v253 = vld [vmem:[%s212 + $0x60] sm:$0xff]
      %v254 = vld [vmem:[%s212 + $0x68] sm:$0xff]
      %v255 = vld [vmem:[%s212 + $0x70] sm:$0xff]
      %v256 = vld [vmem:[%s212 + $0x78] sm:$0xff]
      %v257 = vld [vmem:[%s215] sm:$0x1]
      %v259 = vlaneseq
      %v260 = vshrl.u32 %v259, 7
      %v261 = vsub.s32 0, %v260
      %v262 = vrot.slane %v257, %v261
      %264 = vmatprep.subr.mxu0 0.0
      %265 = vmatpush1.msra.mxu0 %v241
      %266 = vmatprep.subr.mxu0 0.0
      %267 = vmatpush1.msra.mxu0 %v242
      %268 = vmatprep.subr.mxu0 0.0
      %269 = vmatpush1.msra.mxu0 %v243
      %270 = vmatprep.subr.mxu0 0.0
      %271 = vmatpush1.msra.mxu0 %v244
      %272 = vmatprep.subr.mxu0 0.0
      %273 = vmatpush1.msra.mxu0 %v245
      %274 = vmatprep.subr.mxu0 0.0
      %275 = vmatpush1.msra.mxu0 %v246
      %276 = vmatprep.subr.mxu0 0.0
      %277 = vmatpush1.msra.mxu0 %v247
      %278 = vmatprep.subr.mxu0 0.0
      %279 = vmatpush1.msra.mxu0 %v248
      %280 = vmatprep.subr.mxu0 0.0
      %281 = vmatpush1.msra.mxu0 %v249
      %282 = vmatprep.subr.mxu0 0.0
      %283 = vmatpush1.msra.mxu0 %v250
      %284 = vmatprep.subr.mxu0 0.0
      %285 = vmatpush1.msra.mxu0 %v251
      %286 = vmatprep.subr.mxu0 0.0
      %287 = vmatpush1.msra.mxu0 %v252
      %288 = vmatprep.subr.mxu0 0.0
      %289 = vmatpush1.msra.mxu0 %v253
      %290 = vmatprep.subr.mxu0 0.0
      %291 = vmatpush1.msra.mxu0 %v254
      %292 = vmatprep.subr.mxu0 0.0
      %293 = vmatpush1.msra.mxu0 %v255
      %294 = vmatprep.subr.mxu0 0.0
      %295 = vmatpush1.msra.mxu0 %v256
      %296 = vmatprep.subr.mxu0 0.0
      %297 = vmatpush1.msra.mxu0 0.0
      %298 = vmatprep.subr.mxu0 0.0
      %299 = vmatpush1.msra.mxu0 0.0
      %300 = vmatprep.subr.mxu0 0.0
      %301 = vmatpush1.msra.mxu0 0.0
      %302 = vmatprep.subr.mxu0 0.0
      %303 = vmatpush1.msra.mxu0 0.0
      %304 = vmatprep.subr.mxu0 0.0
      %305 = vmatpush1.msra.mxu0 0.0
      %306 = vmatprep.subr.mxu0 0.0
      %307 = vmatpush1.msra.mxu0 0.0
      %308 = vmatprep.subr.mxu0 0.0
      %309 = vmatpush1.msra.mxu0 0.0
      %310 = vmatprep.subr.mxu0 0.0
      %311 = vmatpush1.msra.mxu0 0.0
      %312 = vmatprep.subr.mxu0 0.0
      %313 = vmatpush1.msra.mxu0 0.0
      %314 = vmatprep.subr.mxu0 0.0
      %315 = vmatpush1.msra.mxu0 0.0
      %316 = vmatprep.subr.mxu0 0.0
      %317 = vmatpush1.msra.mxu0 0.0
      %318 = vmatprep.subr.mxu0 0.0
      %319 = vmatpush1.msra.mxu0 0.0
      %320 = vmatprep.subr.mxu0 0.0
      %321 = vmatpush1.msra.mxu0 0.0
      %322 = vmatprep.subr.mxu0 0.0
      %323 = vmatpush1.msra.mxu0 0.0
      %324 = vmatprep.subr.mxu0 0.0
      %325 = vmatpush1.msra.mxu0 0.0
      %326 = vmatprep.subr.mxu0 0.0
      %327 = vmatpush1.msra.mxu0 0.0
      %328 = vmatprep.mubr.f32.mxu0 0.0
      %329 = vmatmul.mubr.f32.gmra.mrb[0].mxu0 %v225
      %v330 = vpop.f32.mrb[0].mxu0
      %v331 = vadd.f32 %v262, %v330
      %v332 = vpop.f32.mrb[0].mxu0
      %333 = vmatprep.mubr.f32.mxu0 0.0
      %334 = vmatmul.mubr.f32.gmra.mrb[0].mxu0 %v226
      %v335 = vpop.f32.mrb[0].mxu0
      %v336 = vadd.f32 %v262, %v335
      %v337 = vpop.f32.mrb[0].mxu0
      %338 = vmatprep.mubr.f32.mxu0 0.0
      %339 = vmatmul.mubr.f32.gmra.mrb[0].mxu0 %v227
      %v340 = vpop.f32.mrb[0].mxu0
      %v341 = vadd.f32 %v262, %v340
      %v342 = vpop.f32.mrb[0].mxu0
      %343 = vmatprep.mubr.f32.mxu0 0.0
      %344 = vmatmul.mubr.f32.gmra.mrb[0].mxu0 %v228
      %v345 = vpop.f32.mrb[0].mxu0
      %v346 = vadd.f32 %v262, %v345
      %v347 = vpop.f32.mrb[0].mxu0
      %348 = vmatprep.mubr.f32.mxu0 0.0
      %349 = vmatmul.mubr.f32.gmra.mrb[0].mxu0 %v229
      %v350 = vpop.f32.mrb[0].mxu0
      %v351 = vadd.f32 %v262, %v350
      %v352 = vpop.f32.mrb[0].mxu0
      %353 = vmatprep.mubr.f32.mxu0 0.0
      %354 = vmatmul.mubr.f32.gmra.mrb[0].mxu0 %v230
      %v355 = vpop.f32.mrb[0].mxu0
      %v356 = vadd.f32 %v262, %v355
      %v357 = vpop.f32.mrb[0].mxu0
      %358 = vmatprep.mubr.f32.mxu0 0.0
      %359 = vmatmul.mubr.f32.gmra.mrb[0].mxu0 %v231
      %v360 = vpop.f32.mrb[0].mxu0
      %v361 = vadd.f32 %v262, %v360
      %v362 = vpop.f32.mrb[0].mxu0
      %363 = vmatprep.mubr.f32.mxu0 0.0
      %364 = vmatmul.mubr.f32.gmra.mrb[0].mxu0 %v232
      %v365 = vpop.f32.mrb[0].mxu0
      %v366 = vadd.f32 %v262, %v365
      %v367 = vpop.f32.mrb[0].mxu0
      %368 = vmatprep.mubr.f32.mxu0 0.0
      %369 = vmatmul.mubr.f32.gmra.mrb[0].mxu0 %v233
      %v370 = vpop.f32.mrb[0].mxu0
      %v371 = vadd.f32 %v262, %v370
      %v372 = vpop.f32.mrb[0].mxu0
      %373 = vmatprep.mubr.f32.mxu0 0.0
      %374 = vmatmul.mubr.f32.gmra.mrb[0].mxu0 %v234
      %v375 = vpop.f32.mrb[0].mxu0
      %v376 = vadd.f32 %v262, %v375
      %v377 = vpop.f32.mrb[0].mxu0
      %378 = vmatprep.mubr.f32.mxu0 0.0
      %379 = vmatmul.mubr.f32.gmra.mrb[0].mxu0 %v235
      %v380 = vpop.f32.mrb[0].mxu0
      %v381 = vadd.f32 %v262, %v380
      %v382 = vpop.f32.mrb[0].mxu0
      %383 = vmatprep.mubr.f32.mxu0 0.0
      %384 = vmatmul.mubr.f32.gmra.mrb[0].mxu0 %v236
      %v385 = vpop.f32.mrb[0].mxu0
      %v386 = vadd.f32 %v262, %v385
      %v387 = vpop.f32.mrb[0].mxu0
      %388 = vmatprep.mubr.f32.mxu0 0.0
      %389 = vmatmul.mubr.f32.gmra.mrb[0].mxu0 %v237
      %v390 = vpop.f32.mrb[0].mxu0
      %v391 = vadd.f32 %v262, %v390
      %v392 = vpop.f32.mrb[0].mxu0
      %393 = vmatprep.mubr.f32.mxu0 0.0
      %394 = vmatmul.mubr.f32.gmra.mrb[0].mxu0 %v238
      %v395 = vpop.f32.mrb[0].mxu0
      %v396 = vadd.f32 %v262, %v395
      %v397 = vpop.f32.mrb[0].mxu0
      %398 = vmatprep.mubr.f32.mxu0 0.0
      %399 = vmatmul.mubr.f32.gmra.mrb[0].mxu0 %v239
      %v400 = vpop.f32.mrb[0].mxu0
      %v401 = vadd.f32 %v262, %v400
      %v402 = vpop.f32.mrb[0].mxu0
      %403 = vmatprep.mubr.f32.mxu0 0.0
      %404 = vmatmul.mubr.f32.gmra.mrb[0].mxu0 %v240
      %v405 = vpop.f32.mrb[0].mxu0
      %v406 = vadd.f32 %v262, %v405
      %v407 = vpop.f32.mrb[0].mxu0
      %408 = vdwg.mxu0
      %409 = vst [vmem:[%s223] sm:$0xff] %v331
      %410 = vst [vmem:[%s223 + $0x8] sm:$0xff] %v336
      %411 = vst [vmem:[%s223 + $0x10] sm:$0xff] %v341
      %412 = vst [vmem:[%s223 + $0x18] sm:$0xff] %v346
      %413 = vst [vmem:[%s223 + $0x20] sm:$0xff] %v351
      %414 = vst [vmem:[%s223 + $0x28] sm:$0xff] %v356
      %415 = vst [vmem:[%s223 + $0x30] sm:$0xff] %v361
      %416 = vst [vmem:[%s223 + $0x38] sm:$0xff] %v366
      %417 = vst [vmem:[%s223 + $0x40] sm:$0xff] %v371
      %418 = vst [vmem:[%s223 + $0x48] sm:$0xff] %v376
      %419 = vst [vmem:[%s223 + $0x50] sm:$0xff] %v381
      %420 = vst [vmem:[%s223 + $0x58] sm:$0xff] %v386
      %421 = vst [vmem:[%s223 + $0x60] sm:$0xff] %v391
      %422 = vst [vmem:[%s223 + $0x68] sm:$0xff] %v396
      %423 = vst [vmem:[%s223 + $0x70] sm:$0xff] %v401
      %424 = vst [vmem:[%s223 + $0x78] sm:$0xff] %v406
      %s425 = smul.u32 16, %s18
      %p426 = scmp.lt.s32.totalorder %s425, 31
      %s427 = scalar_select %p426, %s425, 31
      %p428 = scmp.lt.s32.totalorder %s19, 0
      %s429 = scalar_select %p428, %s19, 0
      %s430 = sadd.s32 %s429, %s427
      %s431 = smul.addr %s430, 8
      %s432 = scalar_lea.vmem %s3, %s431
      // Predicated region
      $region33: #{_overlap_patch_embed_fwd.1} parent=31 // pred_check
        %p433 = pneg %p124
      $region34: #{_overlap_patch_embed_fwd.1} parent=31 // pred_check_branch
        %435 = sbr.rel (%p433) target = $region36
      $region35: #{_overlap_patch_embed_fwd.1} parent=31 // pred_region
        %s436 = smul.u32 16, %s18
      $region36: #{_overlap_patch_embed_fwd.1} parent=31 // pred_fallthru
        _
    $region32: #{_overlap_patch_embed_fwd.1} parent=5 // pred_fallthru
      _
    %p437 = scmp.le.s32.totalorder 2, %s9
    // Predicated region
    $region37: #{_overlap_patch_embed_fwd.1} parent=5 // pred_check
      %p438 = pneg %p437
    $region38: #{_overlap_patch_embed_fwd.1} parent=5 // pred_check_branch
      %440 = sbr.rel (%p438) target = $region40
    $region39: #{_overlap_patch_embed_fwd.1} parent=5 // pred_region
      %s441 = ssub.s32 %s9, 2
      // Predicated region
      $region41: #{_overlap_patch_embed_fwd.1} parent=39 // pred_check
        %p442 = pneg %p130
      $region42: #{_overlap_patch_embed_fwd.1} parent=39 // pred_check_branch
        %444 = sbr.rel (%p442) target = $region44
      $region43: #{_overlap_patch_embed_fwd.1} parent=39 // pred_region
        %s445 = smul.u32 16, %s20
        %p446 = scmp.lt.s32.totalorder %s445, 31
        %s447 = scalar_select %p446, %s445, 31
        %p448 = scmp.lt.s32.totalorder %s21, 0
        %s449 = scalar_select %p448, %s21, 0
        %s450 = sadd.s32 %s449, %s447
        %s451 = smul.addr %s450, 8
        %s452 = scalar_lea.vmem %s3, %s451
      $region44: #{_overlap_patch_embed_fwd.1} parent=39 // pred_fallthru
        _
    $region40: #{_overlap_patch_embed_fwd.1} parent=5 // pred_fallthru
      _
  $region6: #{_overlap_patch_embed_fwd.1} parent=0 // loop_footer
    %s13 = sadd.s32 1, %s9
  $region7: #{_overlap_patch_embed_fwd.1} parent=0 // loop_footer_branch
    %8 = sbr.rel target = $region3
  $region8: #{_overlap_patch_embed_fwd.1} parent=0 // loop_exit
    _

</llo_original>
